<compile_context>
chip_gen: v7x
topology: tpu7x:2x2x1
jax: 0.10.0
libtpu: 0.0.40
codegen_flags: <defaults>
</compile_context>

<pallas_src>
import jax
import jax.numpy as jnp
from jax.experimental import pallas as pl
from jax.experimental.pallas import tpu as pltpu


def _blur_kernel(x_ref, out_ref):
    # x_ref / out_ref: (TP, H, W) block of independent (batch*channel) planes.
    _, H, W = x_ref.shape
    x = x_ref[...].astype(jnp.float32)

    # ---- Horizontal pass: h[j] = x[j-1] + 2*x[j] + x[j+1] with reflect-101.
    # Reflect is folded directly into the shifted-neighbour values, so no
    # masked / offset partial stores are needed and h never touches VMEM
    # scratch.
    nbr_l = jnp.concatenate([x[:, :, 1:2], x[:, :, :W - 1]], axis=2)       # x[j-1], j=0 -> x[1]
    nbr_r = jnp.concatenate([x[:, :, 1:], x[:, :, W - 2:W - 1]], axis=2)   # x[j+1], j=W-1 -> x[W-2]
    h = nbr_l + (x + x) + nbr_r

    # ---- Vertical pass (sublane shifts) + single 1/16 normalization.
    nbr_u = jnp.concatenate([h[:, 1:2, :], h[:, :H - 1, :]], axis=1)       # h[i-1], i=0 -> h[1]
    nbr_d = jnp.concatenate([h[:, 1:, :], h[:, H - 2:H - 1, :]], axis=1)   # h[i+1], i=H-1 -> h[H-2]

    # Single full-width, lane-dense store.
    out_ref[...] = ((nbr_u + (h + h) + nbr_d) * (1.0 / 16.0)).astype(out_ref.dtype)


def _pick_budget_bytes():
    """Per-block (f32 plane bytes) budget, chip aware; conservative fallback."""
    try:
        vmem = pltpu.get_tpu_info().vmem_capacity_bytes
    except Exception:  # pragma: no cover - info query unavailable
        vmem = 64 << 20
    # v5e/v6e have 128 MiB VMEM -> bigger blocks (fewer ~0.35us grid steps,
    # better DMA efficiency); v7x has only 64 MiB -> keep blocks modest.
    return (6 << 20) if vmem >= (96 << 20) else (2 << 20)


def _planes_per_block(n_planes, plane_bytes, budget_bytes):
    """Planes per grid step: fill the budget, but keep >= 4 grid steps so a
    2-TensorCore chip (v7x) can shard the parallel axis."""
    cap = int(max(1, min(n_planes, budget_bytes // max(plane_bytes, 1))))
    if n_planes >= 4:
        cap = min(cap, max(1, n_planes // 4))
    return cap


def blur(x):
    """StyleGAN2 Blur forward. x: (B, C, H, W) float -> same shape/dtype."""
    B, C, H, W = x.shape
    assert H >= 2 and W >= 2, "reflect padding requires H >= 2 and W >= 2"

    P = B * C
    xf = x.reshape(P, H, W)  # free reshape; collapse batch*channel into one axis

    plane_f32_bytes = H * W * 4
    budget = _pick_budget_bytes()
    tp = _planes_per_block(P, plane_f32_bytes, budget)
    grid = (pl.cdiv(P, tp),)  # ragged last block is fine: planes are independent
                              # and out-of-range output writes are masked.

    # TODO(synk): for planes larger than the block budget (tp == 1 still over
    # budget, e.g. 2048x2048 f32), tile H into row strips with a 1-row halo
    # instead of whole-plane blocks so v7x's 64 MiB VMEM is never exceeded.

    # VMEM bound from the actual block: double-buffered in/out blocks plus f32
    # value temporaries (x, h, shifted neighbours) with headroom.
    blk_io = tp * H * W * x.dtype.itemsize
    blk_f32 = tp * H * W * 4
    vmem_limit = int(min(100 << 20, 4 * blk_io + 8 * blk_f32 + (4 << 20)))

    out = pl.pallas_call(
        _blur_kernel,
        out_shape=jax.ShapeDtypeStruct((P, H, W), x.dtype),
        grid=grid,
        in_specs=[pl.BlockSpec((tp, H, W), lambda i: (i, 0, 0))],
        out_specs=pl.BlockSpec((tp, H, W), lambda i: (i, 0, 0)),
        compiler_params=pltpu.CompilerParams(
            dimension_semantics=("parallel",),
            vmem_limit_bytes=vmem_limit,
        ),
        cost_estimate=pl.CostEstimate(
            flops=7 * P * H * W,
            transcendentals=0,
            bytes_accessed=2 * x.dtype.itemsize * P * H * W,
        ),
    )(xf)
    return out.reshape(B, C, H, W)


def _reference_blur(x):
    """Pure-JAX reference: depthwise 3x3 conv with reflect padding."""
    B, C, H, W = x.shape
    f = jnp.array([1.0, 2.0, 1.0], dtype=jnp.float32)
    k = f[None, :] * f[:, None]
    k = k / jnp.sum(k)
    xpad = jnp.pad(x, ((0, 0), (0, 0), (1, 1), (1, 1)), mode="reflect")
    w = jnp.broadcast_to(k[None, None, :, :], (C, 1, 3, 3))
    return jax.lax.conv_general_dilated(
        xpad, w, window_strides=(1, 1), padding="VALID",
        dimension_numbers=("NCHW", "OIHW", "NCHW"),
        feature_group_count=C,
    )


if __name__ == "__main__":
    key = jax.random.PRNGKey(0)
    x = jax.random.normal(key, (2, 4, 16, 16), dtype=jnp.float32)

    out = blur(x)
    out = jax.block_until_ready(out)

    ref = _reference_blur(x)
    assert out.shape == x.shape and out.dtype == x.dtype
    assert jnp.allclose(out, ref, atol=1e-5, rtol=1e-5)

    print("KERNEL_OK")
</pallas_src>

<mosaic_0001>
module attributes {stable_mosaic.version = 11 : i64} {
  func.func @_blur_kernel(%arg0: i32, %arg1: memref<2x16x16xf32, #tpu.memory_space<vmem>>, %arg2: memref<2x16x16xf32, #tpu.memory_space<vmem>>) attributes {dimension_semantics = [#tpu.dimension_semantics<parallel>], iteration_bounds = array<i64: 4>, scalar_prefetch = 0 : i64, scratch_operands = 0 : i64, tpu.core_type = #tpu.core_type<tc>, window_params = [{transform_indices = @transform_0, window_bounds = array<i64: 2, 16, 16>}, {transform_indices = @transform_1, window_bounds = array<i64: 2, 16, 16>}]} {
    %c0 = arith.constant 0 : index
    %c0_0 = arith.constant 0 : index
    %c0_1 = arith.constant 0 : index
    %0 = vector.load %arg1[%c0, %c0_0, %c0_1] : memref<2x16x16xf32, #tpu.memory_space<vmem>>, vector<2x16x16xf32>
    %1 = vector.extract_strided_slice %0 {offsets = [0, 0, 1], sizes = [2, 16, 1], strides = [1, 1, 1]} : vector<2x16x16xf32> to vector<2x16x1xf32>
    %2 = vector.extract_strided_slice %0 {offsets = [0, 0, 0], sizes = [2, 16, 15], strides = [1, 1, 1]} : vector<2x16x16xf32> to vector<2x16x15xf32>
    %3 = tpu.concatenate %1, %2 in 2 : vector<2x16x1xf32>, vector<2x16x15xf32> -> vector<2x16x16xf32>
    %4 = vector.extract_strided_slice %0 {offsets = [0, 0, 1], sizes = [2, 16, 15], strides = [1, 1, 1]} : vector<2x16x16xf32> to vector<2x16x15xf32>
    %5 = vector.extract_strided_slice %0 {offsets = [0, 0, 14], sizes = [2, 16, 1], strides = [1, 1, 1]} : vector<2x16x16xf32> to vector<2x16x1xf32>
    %6 = tpu.concatenate %4, %5 in 2 : vector<2x16x15xf32>, vector<2x16x1xf32> -> vector<2x16x16xf32>
    %7 = arith.addf %0, %0 : vector<2x16x16xf32>
    %8 = arith.addf %3, %7 : vector<2x16x16xf32>
    %9 = arith.addf %8, %6 : vector<2x16x16xf32>
    %10 = vector.extract_strided_slice %9 {offsets = [0, 1, 0], sizes = [2, 1, 16], strides = [1, 1, 1]} : vector<2x16x16xf32> to vector<2x1x16xf32>
    %11 = vector.extract_strided_slice %9 {offsets = [0, 0, 0], sizes = [2, 15, 16], strides = [1, 1, 1]} : vector<2x16x16xf32> to vector<2x15x16xf32>
    %12 = tpu.concatenate %10, %11 in 1 : vector<2x1x16xf32>, vector<2x15x16xf32> -> vector<2x16x16xf32>
    %13 = vector.extract_strided_slice %9 {offsets = [0, 1, 0], sizes = [2, 15, 16], strides = [1, 1, 1]} : vector<2x16x16xf32> to vector<2x15x16xf32>
    %14 = vector.extract_strided_slice %9 {offsets = [0, 14, 0], sizes = [2, 1, 16], strides = [1, 1, 1]} : vector<2x16x16xf32> to vector<2x1x16xf32>
    %15 = tpu.concatenate %13, %14 in 1 : vector<2x15x16xf32>, vector<2x1x16xf32> -> vector<2x16x16xf32>
    %16 = arith.addf %9, %9 : vector<2x16x16xf32>
    %17 = arith.addf %12, %16 : vector<2x16x16xf32>
    %18 = arith.addf %17, %15 : vector<2x16x16xf32>
    %cst = arith.constant 6.250000e-02 : f32
    %19 = vector.broadcast %cst : f32 to vector<2x16x16xf32>
    %20 = arith.mulf %18, %19 : vector<2x16x16xf32>
    %c0_2 = arith.constant 0 : index
    %c0_3 = arith.constant 0 : index
    %c0_4 = arith.constant 0 : index
    %21 = vector.load %arg2[%c0_2, %c0_3, %c0_4] : memref<2x16x16xf32, #tpu.memory_space<vmem>>, vector<2x16x16xf32>
    tpu.vector_store %arg2[%c0_2, %c0_3, %c0_4], %20 {strides = array<i32>} : memref<2x16x16xf32, #tpu.memory_space<vmem>>, vector<2x16x16xf32>,
    return
  }
  func.func @transform_0(%arg0: i32) -> (i32, i32, i32) {
    %c0_i32 = arith.constant 0 : i32
    %c0_i32_0 = arith.constant 0 : i32
    %c0_i32_1 = arith.constant 0 : i32
    return %arg0, %c0_i32, %c0_i32_0 : i32, i32, i32
  }
  func.func @transform_1(%arg0: i32) -> (i32, i32, i32) {
    %c0_i32 = arith.constant 0 : i32
    %c0_i32_0 = arith.constant 0 : i32
    %c0_i32_1 = arith.constant 0 : i32
    return %arg0, %c0_i32, %c0_i32_0 : i32, i32, i32
  }
}

</mosaic_0001>

<llo_original>
// kernel: tpu_custom_call.1
$region0: #{tpu_custom_call.1}
  #allocation0 [shape = 'u32[]', space=smem, size = 0x4, offset = 0x4, fixed_abs, tag = 'smem constant byte address 0x4 - core index']
  #allocation1 [shape = 'u32[144,128]{1,0:T(1,128)}', space=vmem, size = 0x12000, scoped, tag = 'internal scratch']
  %s0 = inlined_call_operand.hbm [shape: f32[8,16,16], index: 0, kind: input, shape index: {}]
  %s1 = inlined_call_operand.hbm [shape: f32[8,16,16], index: 1, kind: output, shape index: {}]
  %s2 = sld [smem:[#allocation0]]
  $region41: #{tpu_custom_call.1} parent=0
    _
  %s4 = ssub.s32 1, %s2
  %s5 = scalar_select 0, %s4, %s2
  $region1: #{tpu_custom_call.1} parent=0
    #allocation2 [shape = 'u8[32768]{0}', space=vmem, size = 0x8000, scoped, tag = 'input window, operand 0']
    #allocation3 [shape = 's32[2]{0}', space=sflag, size = 0x8, scoped, tag = 'scoped memory for tpu_custom_call.1']
    #allocation4 [shape = 's32[2]{0}', space=sflag, size = 0x8, scoped, tag = 'scoped memory for tpu_custom_call.1']
    #allocation5 [shape = 'u8[32768]{0}', space=vmem, size = 0x8000, scoped, tag = 'output window, operand 0']
    %6 = vsyncpa [#allocation3], 0
    %s7 = scalar_lea.sflag [#allocation3], 1
    %8 = vsyncpa %s7, 0
    %9 = vsyncpa [#allocation4], 0
    %s10 = scalar_lea.sflag [#allocation4], 1
    %11 = vsyncpa %s10, 0
    loop: start=0, step=1, limit=6
    $region2: #{tpu_custom_call.1} parent=1 // loop_pre_header
      _
    $region3: #{tpu_custom_call.1} parent=1 // loop_header
      %s13 = sphi 0, %s17
      %p14 = scmp.ge.s32.totalorder %s13, 6
      %s23 = sphi 0, %s25
      %s26 = sphi 0, %s23
      %s27 = sphi 0, %s26
      %s43 = sphi 0, %s27
      %s49 = sphi 0, %s51
      %s52 = sphi 0, %s49
      %s53 = sphi 0, %s52
      %s69 = sphi 0, %s53
    $region4: #{tpu_custom_call.1} parent=1 // loop_header_branch
      %16 = sbr.rel (%p14) target = $region8
    $region5: #{tpu_custom_call.1} parent=1 // loop_body
      %s18 = ssub.s32 %s13, 1
      %s19 = ssub.s32 %s13, 2
      %s20 = sadd.s32 %s13, 1
      %s21 = ssub.s32 %s13, %s20
      %p22 = scmp.eq.s32.totalorder %s21, 0
      %s24 = sadd.s32 %s23, 1
      %s25 = scalar_select %p22, %s23, %s24
      %p28 = pneg %p22
      %p29 = scmp.eq.s32.totalorder %s13, 3
      %p30 = por %p28, %p29
      %p31 = scmp.ne.s32.totalorder %s23, %s26
      %p32 = scmp.eq.s32.totalorder %s13, 0
      %p33 = por %p31, %p32
      %p34 = scmp.ne.s32.totalorder %s23, %s26
      %p35 = scmp.eq.s32.totalorder %s18, 3
      %p36 = por %p34, %p35
      %p37 = scmp.ne.s32.totalorder %s26, %s27
      %p38 = scmp.eq.s32.totalorder %s18, 0
      %p39 = por %p37, %p38
      %p40 = scmp.ne.s32.totalorder %s26, %s27
      %p41 = scmp.eq.s32.totalorder %s19, 3
      %p42 = por %p40, %p41
      %p44 = scmp.ne.s32.totalorder %s27, %s43
      %p45 = scmp.eq.s32.totalorder %s19, 0
      %p46 = por %p44, %p45
      %s47 = ssub.s32 %s13, %s20
      %p48 = scmp.eq.s32.totalorder %s47, 0
      %s50 = sadd.s32 %s49, 1
      %s51 = scalar_select %p48, %s49, %s50
      %p54 = pneg %p48
      %p55 = scmp.eq.s32.totalorder %s13, 3
      %p56 = por %p54, %p55
      %p57 = scmp.ne.s32.totalorder %s49, %s52
      %p58 = scmp.eq.s32.totalorder %s13, 0
      %p59 = por %p57, %p58
      %p60 = scmp.ne.s32.totalorder %s49, %s52
      %p61 = scmp.eq.s32.totalorder %s18, 3
      %p62 = por %p60, %p61
      %p63 = scmp.ne.s32.totalorder %s52, %s53
      %p64 = scmp.eq.s32.totalorder %s18, 0
      %p65 = por %p63, %p64
      %p66 = scmp.ne.s32.totalorder %s52, %s53
      %p67 = scmp.eq.s32.totalorder %s19, 3
      %p68 = por %p66, %p67
      %p70 = scmp.ne.s32.totalorder %s53, %s69
      %p71 = scmp.eq.s32.totalorder %s19, 0
      %p72 = por %p70, %p71
      %p73 = scmp.le.s32.totalorder 1, %s13
      %p74 = scmp.lt.s32.totalorder %s13, 5
      %p75 = pnand %p73, %p74
      %p76 = pneg %p75
      // Predicated region
      $region9: #{tpu_custom_call.1} parent=5 // pred_check
        _
      $region10: #{tpu_custom_call.1} parent=5 // pred_check_branch
        %78 = sbr.rel (%p75) target = $region12
      $region11: #{tpu_custom_call.1} parent=5 // pred_region
        %s79 = ssub.s32 %s13, 1
      $region12: #{tpu_custom_call.1} parent=5 // pred_fallthru
        _
      %p80 = scmp.lt.s32.totalorder %s13, 4
      // Predicated region
      $region13: #{tpu_custom_call.1} parent=5 // pred_check
        %p81 = pneg %p80
      $region14: #{tpu_custom_call.1} parent=5 // pred_check_branch
        %83 = sbr.rel (%p81) target = $region16
      $region15: #{tpu_custom_call.1} parent=5 // pred_region
        // Predicated region
        $region17: #{tpu_custom_call.1} parent=15 // pred_check
          %p84 = pneg %p33
        $region18: #{tpu_custom_call.1} parent=15 // pred_check_branch
          %86 = sbr.rel (%p84) target = $region20
        $region19: #{tpu_custom_call.1} parent=15 // pred_region
          %s87 = sand.u32 %s23, 1
          %s88 = scalar_lea.sflag [#allocation3], %s87
          %s89 = sand.u32 %s23, 1
          %s90 = smul.addr %s89, 32
          %s91 = scalar_lea.vmem [#allocation2], %s90
          %s92 = smul.u32 2, %s13
          %s94 = ssub.s32 512, 512
          %95 = vsyncadd %s88, %s94
          %s96 = smul.addr %s92, 2
          %s97 = smul.addr %s96, 128
          %s98 = scalar_lea.hbm %s0, %s97
          %s99 = sshll.u32 %s91, 4
          %s100 = int_to_ptr.vmem [resolvable:$true] %s99
          %105 = dma.hbm_to_vmem [thread:$0]  %s98, 512, %s100, %s88, 128, 128, 8
        $region20: #{tpu_custom_call.1} parent=15 // pred_fallthru
          _
      $region16: #{tpu_custom_call.1} parent=5 // pred_fallthru
        _
      %p106 = scmp.le.s32.totalorder 1, %s13
      %p107 = scmp.lt.s32.totalorder %s13, 5
      %p108 = pnand %p106, %p107
      %p109 = pneg %p108
      // Predicated region
      $region21: #{tpu_custom_call.1} parent=5 // pred_check
        _
      $region22: #{tpu_custom_call.1} parent=5 // pred_check_branch
        %111 = sbr.rel (%p108) target = $region24
      $region23: #{tpu_custom_call.1} parent=5 // pred_region
        %s112 = ssub.s32 %s13, 1
        %s113 = sand.u32 %s26, 1
        %s114 = scalar_lea.sflag [#allocation3], %s113
        %s115 = sand.u32 %s26, 1
        %s116 = smul.addr %s115, 32
        %s117 = scalar_lea.vmem [#allocation2], %s116
        // Predicated region
        $region25: #{tpu_custom_call.1} parent=23 // pred_check
          %p118 = pneg %p39
        $region26: #{tpu_custom_call.1} parent=23 // pred_check_branch
          %120 = sbr.rel (%p118) target = $region28
        $region27: #{tpu_custom_call.1} parent=23 // pred_region
          %121 = dma.done %s114, 512
        $region28: #{tpu_custom_call.1} parent=23 // pred_fallthru
          _
        %s122 = sand.u32 %s26, 1
        %s123 = scalar_lea.sflag [#allocation3], %s122
        %s124 = sand.u32 %s26, 1
        %s125 = smul.addr %s124, 32
        %s126 = scalar_lea.vmem [#allocation2], %s125
        %p127 = pneg %p39
        %p128 = pneg %p36
        %p129 = pneg %p65
        %p130 = pneg %p62
        %s131 = sand.u32 %s52, 1
        %s132 = scalar_lea.sflag [#allocation4], %s131
        %s133 = sand.u32 %s52, 1
        %s134 = smul.addr %s133, 32
        %s135 = scalar_lea.vmem [#allocation5], %s134
        %s136 = smul.u32 2, %s18
        %s137 = smul.u32 2, %s18
        %v138 = vld [vmem:[%s117] sm:$0xff]
        %v139 = vld [vmem:[%s117 + $0x8] sm:$0xff]
        %v140 = vld [vmem:[%s117 + $0x10] sm:$0xff]
        %v141 = vld [vmem:[%s117 + $0x18] sm:$0xff]
        %146 = vrot.lane.b32.xlu0 %v138, 127
        %v147 = vpop.permute.xlu0 %146
        %148 = vrot.lane.b32.xlu0 %v139, 127
        %v149 = vpop.permute.xlu0 %148
        %150 = vrot.lane.b32.xlu0 %v140, 127
        %v151 = vpop.permute.xlu0 %150
        %152 = vrot.lane.b32.xlu0 %v141, 127
        %v153 = vpop.permute.xlu0 %152
        %158 = vrot.lane.b32.xlu0 %v138, 1
        %v159 = vpop.permute.xlu0 %158
        %160 = vrot.lane.b32.xlu0 %v139, 1
        %v161 = vpop.permute.xlu0 %160
        %162 = vrot.lane.b32.xlu0 %v140, 1
        %v163 = vpop.permute.xlu0 %162
        %164 = vrot.lane.b32.xlu0 %v141, 1
        %v165 = vpop.permute.xlu0 %164
        %vm170 = vcmask 7168
        %v171 = vsel %vm170, %v147, %v159
        %v172 = vsel %vm170, %v149, %v161
        %v173 = vsel %vm170, %v151, %v163
        %v174 = vsel %vm170, %v153, %v165
        %vm175 = vcmask 121856
        %v176 = vsel %vm175, %v147, %v159
        %v177 = vsel %vm175, %v149, %v161
        %v178 = vsel %vm175, %v151, %v163
        %v179 = vsel %vm175, %v153, %v165
        %v180 = vadd.f32 %v138, %v138
        %v181 = vadd.f32 %v139, %v139
        %v182 = vadd.f32 %v140, %v140
        %v183 = vadd.f32 %v141, %v141
        %v184 = vadd.f32 %v171, %v180
        %v185 = vadd.f32 %v172, %v181
        %v186 = vadd.f32 %v173, %v182
        %v187 = vadd.f32 %v174, %v183
        %v188 = vadd.f32 %v184, %v176
        %v189 = vadd.f32 %v185, %v177
        %v190 = vadd.f32 %v186, %v178
        %v191 = vadd.f32 %v187, %v179
        %v194 = vrot.slane %v188, 1
        %v195 = vrot.slane %v190, 1
        %vm200 = vcmask 1040384
        %v201 = vrot.slane %v188, 7
        %v202 = vrot.slane %v189, 7
        %v203 = vsel %vm200, %v201, %v202
        %v204 = vrot.slane %v190, 7
        %v205 = vrot.slane %v191, 7
        %v206 = vsel %vm200, %v204, %v205
        %v211 = vsel %vm200, %v194, %v201
        %v212 = vsel %vm200, %v195, %v204
        %vm213 = vcmask 1046528
        %v214 = vrot.slane %v189, 1
        %v215 = vsel %vm213, %v194, %v214
        %v216 = vrot.slane %v191, 1
        %v217 = vsel %vm213, %v195, %v216
        %v224 = vsel %vm213, %v214, %v202
        %v225 = vsel %vm213, %v216, %v205
        %v226 = vadd.f32 %v188, %v188
        %v227 = vadd.f32 %v189, %v189
        %v228 = vadd.f32 %v190, %v190
        %v229 = vadd.f32 %v191, %v191
        %v230 = vadd.f32 %v211, %v226
        %v231 = vadd.f32 %v203, %v227
        %v232 = vadd.f32 %v212, %v228
        %v233 = vadd.f32 %v206, %v229
        %v234 = vadd.f32 %v230, %v215
        %v235 = vadd.f32 %v231, %v224
        %v236 = vadd.f32 %v232, %v217
        %v237 = vadd.f32 %v233, %v225
        %v238 = vmul.f32 %v234, 0.0625
        %v239 = vmul.f32 %v235, 0.0625
        %v240 = vmul.f32 %v236, 0.0625
        %v241 = vmul.f32 %v237, 0.0625
        %vm242 = vcmask 130048
        %243 = vst.msk [vmem:[%s135] sm:$0xff] %vm242, %v238
        %244 = vst.msk [vmem:[%s135 + $0x8] sm:$0xff] %vm242, %v239
        %245 = vst.msk [vmem:[%s135 + $0x10] sm:$0xff] %vm242, %v240
        %246 = vst.msk [vmem:[%s135 + $0x18] sm:$0xff] %vm242, %v241
        %s247 = sand.u32 %s52, 1
        %s248 = scalar_lea.sflag [#allocation4], %s247
        %s249 = sand.u32 %s52, 1
        %s250 = smul.addr %s249, 32
        %s251 = scalar_lea.vmem [#allocation5], %s250
        // Predicated region
        $region29: #{tpu_custom_call.1} parent=23 // pred_check
          %p252 = pneg %p62
        $region30: #{tpu_custom_call.1} parent=23 // pred_check_branch
          %254 = sbr.rel (%p252) target = $region32
        $region31: #{tpu_custom_call.1} parent=23 // pred_region
          %s255 = smul.u32 2, %s18
          %s257 = ssub.s32 512, 512
          %258 = vsyncadd %s248, %s257
          %s259 = smul.addr %s255, 2
          %s260 = smul.addr %s259, 128
          %s261 = scalar_lea.hbm %s1, %s260
          %s262 = sshll.u32 %s251, 4
          %s263 = int_to_ptr.vmem [resolvable:$true] %s262
          %268 = dma.vmem_to_hbm [thread:$0]  %s263, 512, %s261, %s248, 128, 128, 8
        $region32: #{tpu_custom_call.1} parent=23 // pred_fallthru
          _
      $region24: #{tpu_custom_call.1} parent=5 // pred_fallthru
        _
      %p269 = scmp.le.s32.totalorder 2, %s13
      // Predicated region
      $region33: #{tpu_custom_call.1} parent=5 // pred_check
        %p270 = pneg %p269
      $region34: #{tpu_custom_call.1} parent=5 // pred_check_branch
        %272 = sbr.rel (%p270) target = $region36
      $region35: #{tpu_custom_call.1} parent=5 // pred_region
        %s273 = ssub.s32 %s13, 2
        // Predicated region
        $region37: #{tpu_custom_call.1} parent=35 // pred_check
          %p274 = pneg %p68
        $region38: #{tpu_custom_call.1} parent=35 // pred_check_branch
          %276 = sbr.rel (%p274) target = $region40
        $region39: #{tpu_custom_call.1} parent=35 // pred_region
          %s277 = sand.u32 %s53, 1
          %s278 = scalar_lea.sflag [#allocation4], %s277
          %s279 = sand.u32 %s53, 1
          %s280 = smul.addr %s279, 32
          %s281 = scalar_lea.vmem [#allocation5], %s280
          %282 = dma.done %s278, 512
        $region40: #{tpu_custom_call.1} parent=35 // pred_fallthru
          _
      $region36: #{tpu_custom_call.1} parent=5 // pred_fallthru
        _
    $region6: #{tpu_custom_call.1} parent=1 // loop_footer
      %s17 = sadd.s32 1, %s13
    $region7: #{tpu_custom_call.1} parent=1 // loop_footer_branch
      %12 = sbr.rel target = $region3
    $region8: #{tpu_custom_call.1} parent=1 // loop_exit
      _
    %283 = vsyncpa [#allocation3], 1
    %s284 = scalar_lea.sflag [#allocation3], 1
    %285 = vsyncpa %s284, 1
    %286 = vsyncpa [#allocation4], 1
    %s287 = scalar_lea.sflag [#allocation4], 1
    %288 = vsyncpa %s287, 1

</llo_original>
